<compile_context>
chip_gen: v6e
topology: v6e:2x2x1
jax: 0.10.0
libtpu: 0.0.40
codegen_flags: <defaults>
</compile_context>

<pallas_src>
import jax
import jax.numpy as jnp
from jax.experimental import pallas as pl
from jax.experimental.pallas import tpu as pltpu

_LANE = 128
_SUBLANE = 8


def _round_up(n, m):
    return (n + m - 1) // m * m


def _cdiv(a, b):
    return (a + b - 1) // b


def _pad2d(a, rows, cols):
    r, c = a.shape
    return jnp.pad(a, ((0, rows - r), (0, cols - c)))


def policy_net_kernel(x_ref, w1_ref, w2_ref, w3_ref, b_ref, out_ref):
    """One batch tile: fc1->tanh->fc2->tanh->head->softmax, all in VMEM."""
    cdt = w1_ref.dtype                      # matmul operand dtype (bf16)
    x = x_ref[...].astype(cdt)              # cast in-kernel; x stays f32 in HBM

    # fc1 + tanh   (MXU accumulates in f32; bias add + tanh stay in f32)
    h1 = jnp.dot(x, w1_ref[...], preferred_element_type=jnp.float32)
    h1 = jnp.tanh(h1 + b_ref[0:1, :h1.shape[1]])

    # fc2 + tanh
    h2 = jnp.dot(h1.astype(cdt), w2_ref[...], preferred_element_type=jnp.float32)
    h2 = jnp.tanh(h2 + b_ref[1:2, :h2.shape[1]])

    # action head
    logits = jnp.dot(h2.astype(cdt), w3_ref[...], preferred_element_type=jnp.float32)
    logits = logits + b_ref[2:3, :logits.shape[1]]

    action_size = out_ref.shape[-1]         # static
    padded_actions = logits.shape[-1]       # static (multiple of 128)

    # Only mask when there actually is action-lane padding.
    if padded_actions > action_size:
        lane = jax.lax.broadcasted_iota(jnp.int32, logits.shape, dimension=1)
        logits = jnp.where(lane < action_size, logits, jnp.finfo(jnp.float32).min)

    # Numerically stable softmax with an exact divide (rows sum to 1 exactly
    # up to f32 rounding, matching the PyTorch reference).
    m = jnp.max(logits, axis=-1, keepdims=True)
    e = jnp.exp(logits - m)
    denom = jnp.sum(e, axis=-1, keepdims=True)
    probs = e / denom

    # Narrow, full-last-dim store: only the real action lanes hit HBM.
    out_ref[...] = probs[:, :action_size].astype(out_ref.dtype)


def prepare_params(params, compute_dtype=jnp.bfloat16):
    """One-time parameter prep (lane-pad, cast, stack biases) — hoisted out of
    the per-forward path."""
    w1, b1 = params["w1"], params["b1"]
    w2, b2 = params["w2"], params["b2"]
    w3, b3 = params["w3"], params["b3"]

    state_size, hidden_size = w1.shape
    action_size = w3.shape[1]

    h_p = _round_up(hidden_size, _LANE)
    a_p = _round_up(action_size, _LANE)
    bw = max(h_p, a_p)

    # Zero-pad (pads contribute exactly nothing) and cast matmul operands.
    w1_p = _pad2d(w1, state_size, h_p).astype(compute_dtype)   # (S, h_p)
    w2_p = _pad2d(w2, h_p, h_p).astype(compute_dtype)          # (h_p, h_p)
    w3_p = _pad2d(w3, h_p, a_p).astype(compute_dtype)          # (h_p, a_p)
    b_stack = jnp.concatenate(
        [_pad2d(b1, 1, bw), _pad2d(b2, 1, bw), _pad2d(b3, 1, bw)], axis=0
    ).astype(jnp.float32)                                      # (3, bw)

    return {
        "w1": w1_p, "w2": w2_p, "w3": w3_p, "b": b_stack,
        "state_size": state_size, "action_size": action_size,
    }


def policy_network_forward(x, prepared, *, tile_b=None):
    """x: (batch, state_size) f32; prepared: output of prepare_params()."""
    w1_p, w2_p, w3_p, b_stack = (prepared["w1"], prepared["w2"],
                                 prepared["w3"], prepared["b"])
    batch, state_size = x.shape
    assert state_size == prepared["state_size"]
    action_size = prepared["action_size"]
    h_p = w1_p.shape[1]
    a_p = w3_p.shape[1]
    bw = b_stack.shape[1]

    # Batch tile: big (amortizes ~0.35us/grid-step overhead; per-tile VMEM is
    # only a few MiB even at 2048 rows, far below every chip's limit) but
    # clamped so the grid keeps >=2 "parallel" steps whenever the batch can be
    # split — on v7x that keeps both TensorCores busy.
    if tile_b is None:
        desired = 2048
        if batch > _SUBLANE:
            desired = min(desired, _round_up(_cdiv(batch, 2), _SUBLANE))
        tile_b = min(desired, _round_up(batch, _SUBLANE))
    tile_b = max(_SUBLANE, _round_up(tile_b, _SUBLANE))
    b_p = _round_up(batch, tile_b)

    # Only batch-row padding (state_size columns are untouched — cheap).
    x_p = jnp.pad(x, ((0, b_p - batch), (0, 0))) if b_p != batch else x

    grid = (b_p // tile_b,)
    out_p = pl.pallas_call(
        policy_net_kernel,
        out_shape=jax.ShapeDtypeStruct((b_p, action_size), jnp.float32),
        grid=grid,
        in_specs=[
            pl.BlockSpec((tile_b, state_size), lambda i: (i, 0)),  # x tile (pipelined)
            pl.BlockSpec((state_size, h_p), lambda i: (0, 0)),     # w1 (resident)
            pl.BlockSpec((h_p, h_p), lambda i: (0, 0)),            # w2 (resident)
            pl.BlockSpec((h_p, a_p), lambda i: (0, 0)),            # w3 (resident)
            pl.BlockSpec((3, bw), lambda i: (0, 0)),               # stacked biases
        ],
        out_specs=pl.BlockSpec((tile_b, action_size), lambda i: (i, 0)),
        compiler_params=pltpu.CompilerParams(
            dimension_semantics=("parallel",)),                    # batch shards across TCs
    )(x_p, w1_p, w2_p, w3_p, b_stack)

    return out_p[:batch] if b_p != batch else out_p


def init_params(key, state_size, action_size, hidden_size=128):
    """Deterministic init mimicking nn.Linear; weights stored as (in, out)."""
    ks = jax.random.split(key, 6)

    def linear(kw, kb, fan_in, fan_out):
        bound = 1.0 / jnp.sqrt(fan_in)
        w = jax.random.uniform(kw, (fan_in, fan_out), jnp.float32, -bound, bound)
        b = jax.random.uniform(kb, (1, fan_out), jnp.float32, -bound, bound)
        return w, b

    w1, b1 = linear(ks[0], ks[1], state_size, hidden_size)
    w2, b2 = linear(ks[2], ks[3], hidden_size, hidden_size)
    w3, b3 = linear(ks[4], ks[5], hidden_size, action_size)
    return {"w1": w1, "b1": b1, "w2": w2, "b2": b2, "w3": w3, "b3": b3}


def reference_forward(x, params, compute_dtype):
    """Plain-JAX reference mirroring the kernel's matmul-operand casts."""
    cast = lambda a: a.astype(compute_dtype).astype(jnp.float32)
    h1 = jnp.tanh(cast(x) @ cast(params["w1"]) + params["b1"])
    h2 = jnp.tanh(cast(h1) @ cast(params["w2"]) + params["b2"])
    logits = cast(h2) @ cast(params["w3"]) + params["b3"]
    return jax.nn.softmax(logits, axis=-1)


if __name__ == "__main__":
    key = jax.random.PRNGKey(0)
    batch, state_size, action_size, hidden_size = 8, 8, 4, 32

    k_x, k_p, k_x2 = jax.random.split(key, 3)
    x = jax.random.normal(k_x, (batch, state_size), jnp.float32)
    params = init_params(k_p, state_size, action_size, hidden_size)
    prepared = prepare_params(params)        # one-time param prep (hoisted)

    # Small batch (single grid step).
    probs = jax.block_until_ready(policy_network_forward(x, prepared))
    ref = reference_forward(x, params, jnp.bfloat16)
    assert probs.shape == (batch, action_size)
    assert jnp.allclose(probs, ref, atol=5e-3), "mismatch vs reference (small batch)"
    assert jnp.allclose(jnp.sum(probs, axis=-1), 1.0, atol=1e-5)

    # Larger, non-multiple batch: exercises batch-row padding and a >=2-step
    # "parallel" grid (both TensorCores on v7x).
    big_batch = 1000
    xb = jax.random.normal(k_x2, (big_batch, state_size), jnp.float32)
    probs_b = jax.block_until_ready(policy_network_forward(xb, prepared))
    ref_b = reference_forward(xb, params, jnp.bfloat16)
    assert probs_b.shape == (big_batch, action_size)
    assert jnp.allclose(probs_b, ref_b, atol=5e-3), "mismatch vs reference (big batch)"
    assert jnp.allclose(jnp.sum(probs_b, axis=-1), 1.0, atol=1e-5)

    print("KERNEL_OK")
</pallas_src>

<mosaic_0001>
module attributes {stable_mosaic.version = 11 : i64} {
  func.func @policy_net_kernel(%arg0: i32, %arg1: memref<8x8xf32, #tpu.memory_space<vmem>>, %arg2: memref<8x128xbf16, #tpu.memory_space<vmem>>, %arg3: memref<128x128xbf16, #tpu.memory_space<vmem>>, %arg4: memref<128x128xbf16, #tpu.memory_space<vmem>>, %arg5: memref<3x128xf32, #tpu.memory_space<vmem>>, %arg6: memref<8x4xf32, #tpu.memory_space<vmem>>) attributes {dimension_semantics = [#tpu.dimension_semantics<parallel>], iteration_bounds = array<i64: 1>, scalar_prefetch = 0 : i64, scratch_operands = 0 : i64, tpu.core_type = #tpu.core_type<tc>, window_params = [{transform_indices = @transform_0, window_bounds = array<i64: 8, 8>}, {pipeline_mode = #tpu.pipeline_mode<synchronous>, transform_indices = @transform_1, window_bounds = array<i64: 8, 128>}, {pipeline_mode = #tpu.pipeline_mode<synchronous>, transform_indices = @transform_2, window_bounds = array<i64: 128, 128>}, {pipeline_mode = #tpu.pipeline_mode<synchronous>, transform_indices = @transform_3, window_bounds = array<i64: 128, 128>}, {pipeline_mode = #tpu.pipeline_mode<synchronous>, transform_indices = @transform_4, window_bounds = array<i64: 3, 128>}, {transform_indices = @transform_5, window_bounds = array<i64: 8, 4>}]} {
    %c0 = arith.constant 0 : index
    %c0_0 = arith.constant 0 : index
    %0 = vector.load %arg1[%c0, %c0_0] : memref<8x8xf32, #tpu.memory_space<vmem>>, vector<8x8xf32>
    %1 = arith.truncf %0 : vector<8x8xf32> to vector<8x8xbf16>
    %c0_1 = arith.constant 0 : index
    %c0_2 = arith.constant 0 : index
    %2 = vector.load %arg2[%c0_1, %c0_2] : memref<8x128xbf16, #tpu.memory_space<vmem>>, vector<8x128xbf16>
    %cst = arith.constant dense<0.000000e+00> : vector<8x128xf32>
    %3 = tpu.matmul %1, %2, %cst {dimension_numbers = #tpu.dot_dimension_numbers<[1], [0], [0], [1], [0, 0, 1, 1], [], []>} : vector<8x8xbf16>, vector<8x128xbf16>, vector<8x128xf32> -> vector<8x128xf32>
    %c0_3 = arith.constant 0 : index
    %c0_4 = arith.constant 0 : index
    %4 = vector.load %arg5[%c0_3, %c0_4] : memref<3x128xf32, #tpu.memory_space<vmem>>, vector<1x128xf32>
    %5 = vector.broadcast %4 : vector<1x128xf32> to vector<8x128xf32>
    %6 = arith.addf %3, %5 : vector<8x128xf32>
    %7 = math.tanh %6 : vector<8x128xf32>
    %8 = arith.truncf %7 : vector<8x128xf32> to vector<8x128xbf16>
    %c0_5 = arith.constant 0 : index
    %c0_6 = arith.constant 0 : index
    %9 = vector.load %arg3[%c0_5, %c0_6] : memref<128x128xbf16, #tpu.memory_space<vmem>>, vector<128x128xbf16>
    %cst_7 = arith.constant dense<0.000000e+00> : vector<8x128xf32>
    %10 = tpu.matmul %8, %9, %cst_7 {dimension_numbers = #tpu.dot_dimension_numbers<[1], [0], [0], [1], [0, 0, 1, 1], [], []>} : vector<8x128xbf16>, vector<128x128xbf16>, vector<8x128xf32> -> vector<8x128xf32>
    %c1 = arith.constant 1 : index
    %c0_8 = arith.constant 0 : index
    %11 = vector.load %arg5[%c1, %c0_8] : memref<3x128xf32, #tpu.memory_space<vmem>>, vector<1x128xf32>
    %12 = vector.broadcast %11 : vector<1x128xf32> to vector<8x128xf32>
    %13 = arith.addf %10, %12 : vector<8x128xf32>
    %14 = math.tanh %13 : vector<8x128xf32>
    %15 = arith.truncf %14 : vector<8x128xf32> to vector<8x128xbf16>
    %c0_9 = arith.constant 0 : index
    %c0_10 = arith.constant 0 : index
    %16 = vector.load %arg4[%c0_9, %c0_10] : memref<128x128xbf16, #tpu.memory_space<vmem>>, vector<128x128xbf16>
    %cst_11 = arith.constant dense<0.000000e+00> : vector<8x128xf32>
    %17 = tpu.matmul %15, %16, %cst_11 {dimension_numbers = #tpu.dot_dimension_numbers<[1], [0], [0], [1], [0, 0, 1, 1], [], []>} : vector<8x128xbf16>, vector<128x128xbf16>, vector<8x128xf32> -> vector<8x128xf32>
    %c2 = arith.constant 2 : index
    %c0_12 = arith.constant 0 : index
    %18 = vector.load %arg5[%c2, %c0_12] : memref<3x128xf32, #tpu.memory_space<vmem>>, vector<1x128xf32>
    %19 = vector.broadcast %18 : vector<1x128xf32> to vector<8x128xf32>
    %20 = arith.addf %17, %19 : vector<8x128xf32>
    %21 = tpu.iota {dimensions = array<i32: 1>} : vector<8x128xi32>
    %c4_i32 = arith.constant 4 : i32
    %22 = vector.broadcast %c4_i32 : i32 to vector<8x128xi32>
    %23 = arith.cmpi slt, %21, %22 : vector<8x128xi32>
    %cst_13 = arith.constant -3.40282347E+38 : f32
    %24 = vector.broadcast %cst_13 : f32 to vector<8x128xf32>
    %25 = arith.select %23, %20, %24 : vector<8x128xi1>, vector<8x128xf32>
    %cst_14 = arith.constant dense<0xFF800000> : vector<8xf32>
    %26 = vector.multi_reduction <maximumf>, %25, %cst_14 [1] : vector<8x128xf32> to vector<8xf32>
    %27 = vector.shape_cast %26 : vector<8xf32> to vector<8x1xf32>
    %28 = vector.broadcast %27 : vector<8x1xf32> to vector<8x128xf32>
    %29 = arith.subf %25, %28 : vector<8x128xf32>
    %30 = math.exp %29 : vector<8x128xf32>
    %cst_15 = arith.constant dense<0.000000e+00> : vector<8xf32>
    %31 = vector.multi_reduction <add>, %30, %cst_15 [1] : vector<8x128xf32> to vector<8xf32>
    %32 = vector.shape_cast %31 : vector<8xf32> to vector<8x1xf32>
    %33 = vector.broadcast %32 : vector<8x1xf32> to vector<8x128xf32>
    %34 = arith.divf %30, %33 : vector<8x128xf32>
    %35 = vector.extract_strided_slice %34 {offsets = [0, 0], sizes = [8, 4], strides = [1, 1]} : vector<8x128xf32> to vector<8x4xf32>
    %c0_16 = arith.constant 0 : index
    %c0_17 = arith.constant 0 : index
    %36 = vector.load %arg6[%c0_16, %c0_17] : memref<8x4xf32, #tpu.memory_space<vmem>>, vector<8x4xf32>
    tpu.vector_store %arg6[%c0_16, %c0_17], %35 {strides = array<i32>} : memref<8x4xf32, #tpu.memory_space<vmem>>, vector<8x4xf32>,
    return
  }
  func.func @transform_0(%arg0: i32) -> (i32, i32) {
    %c0_i32 = arith.constant 0 : i32
    %c0_i32_0 = arith.constant 0 : i32
    return %arg0, %c0_i32 : i32, i32
  }
  func.func @transform_1(%arg0: i32) -> (i32, i32) {
    %c0_i32 = arith.constant 0 : i32
    %c0_i32_0 = arith.constant 0 : i32
    %c0_i32_1 = arith.constant 0 : i32
    return %c0_i32, %c0_i32_0 : i32, i32
  }
  func.func @transform_2(%arg0: i32) -> (i32, i32) {
    %c0_i32 = arith.constant 0 : i32
    %c0_i32_0 = arith.constant 0 : i32
    %c0_i32_1 = arith.constant 0 : i32
    return %c0_i32, %c0_i32_0 : i32, i32
  }
  func.func @transform_3(%arg0: i32) -> (i32, i32) {
    %c0_i32 = arith.constant 0 : i32
    %c0_i32_0 = arith.constant 0 : i32
    %c0_i32_1 = arith.constant 0 : i32
    return %c0_i32, %c0_i32_0 : i32, i32
  }
  func.func @transform_4(%arg0: i32) -> (i32, i32) {
    %c0_i32 = arith.constant 0 : i32
    %c0_i32_0 = arith.constant 0 : i32
    %c0_i32_1 = arith.constant 0 : i32
    return %c0_i32, %c0_i32_0 : i32, i32
  }
  func.func @transform_5(%arg0: i32) -> (i32, i32) {
    %c0_i32 = arith.constant 0 : i32
    %c0_i32_0 = arith.constant 0 : i32
    return %arg0, %c0_i32 : i32, i32
  }
}

</mosaic_0001>

<llo_original>
// kernel: tpu_custom_call.1
$region0: #{tpu_custom_call.1}
  #allocation0 [shape = 'u32[]', space=smem, size = 0x4, offset = 0x4, fixed_abs, tag = 'smem constant byte address 0x4 - core index']
  #allocation1 [shape = 'u32[144,128]{1,0:T(1,128)}', space=vmem, size = 0x12000, scoped, tag = 'internal scratch']
  %s0 = inlined_call_operand.hbm [shape: f32[8,8], index: 0, kind: input, shape index: {}]
  %s1 = inlined_call_operand.hbm [shape: bf16[8,128], index: 1, kind: input, shape index: {}]
  %s2 = inlined_call_operand.hbm [shape: bf16[128,128], index: 2, kind: input, shape index: {}]
  %s3 = inlined_call_operand.hbm [shape: bf16[128,128], index: 3, kind: input, shape index: {}]
  %s4 = inlined_call_operand.vmem [shape: f32[3,128], index: 4, kind: input, shape index: {}]
  %s5 = inlined_call_operand.vmem [shape: f32[8,4], index: 5, kind: output, shape index: {}]
  %s6 = sld [smem:[#allocation0]]
  $region46: #{tpu_custom_call.1} parent=0
    _
  %s8 = ssub.s32 1, %s6
  %s9 = scalar_select 0, %s8, %s6
  $region1: #{tpu_custom_call.1} parent=0
    #allocation2 [shape = 'u8[4096]{0}', space=vmem, size = 0x1000, scoped, tag = 'input window, operand 0, single buffered']
    #allocation3 [shape = 's32[1]{0}', space=sflag, size = 0x4, scoped, tag = 'scoped memory for tpu_custom_call.1']
    #allocation4 [shape = 'u8[2048]{0}', space=vmem, size = 0x800, scoped, tag = 'input window, operand 1, single buffered']
    #allocation5 [shape = 's32[1]{0}', space=sflag, size = 0x4, scoped, tag = 'scoped memory for tpu_custom_call.1']
    #allocation6 [shape = 'u8[32768]{0}', space=vmem, size = 0x8000, scoped, tag = 'input window, operand 2, single buffered']
    #allocation7 [shape = 'u8[32768]{0}', space=vmem, size = 0x8000, scoped, tag = 'input window, operand 3, single buffered']
    #allocation8 [shape = 's32[1]{0}', space=sflag, size = 0x4, scoped, tag = 'scoped memory for tpu_custom_call.1']
    %10 = vsyncpa [#allocation3], 0
    %11 = vsyncpa [#allocation5], 0
    %12 = vsyncpa [#allocation8], 0
    // Predicated region
    $region2: #{tpu_custom_call.1} parent=1 // pred_check
      _
    $region3: #{tpu_custom_call.1} parent=1 // pred_check_branch
      %14 = sbr.rel (0) target = $region5
    $region4: #{tpu_custom_call.1} parent=1 // pred_region
      %s16 = ssub.s32 128, 128
      %17 = vsyncadd [#allocation3], %s16
      %s19 = sshll.u32 [#allocation2], 4
      %s20 = int_to_ptr.vmem [resolvable:$true] %s19
      %22 = dma.hbm_to_vmem [thread:$0]  %s0, 128, %s20, [#allocation3]
    $region5: #{tpu_custom_call.1} parent=1 // pred_fallthru
      _
    // Predicated region
    $region6: #{tpu_custom_call.1} parent=1 // pred_check
      _
    $region7: #{tpu_custom_call.1} parent=1 // pred_check_branch
      %24 = sbr.rel (0) target = $region9
    $region8: #{tpu_custom_call.1} parent=1 // pred_region
      %s26 = ssub.s32 64, 64
      %27 = vsyncadd [#allocation5], %s26
      %s29 = sshll.u32 [#allocation4], 4
      %s30 = int_to_ptr.vmem [resolvable:$true] %s29
      %32 = dma.hbm_to_vmem [thread:$0]  %s1, 64, %s30, [#allocation5]
    $region9: #{tpu_custom_call.1} parent=1 // pred_fallthru
      _
    // Predicated region
    $region10: #{tpu_custom_call.1} parent=1 // pred_check
      _
    $region11: #{tpu_custom_call.1} parent=1 // pred_check_branch
      %34 = sbr.rel (0) target = $region13
    $region12: #{tpu_custom_call.1} parent=1 // pred_region
      %s36 = ssub.s32 1024, 1024
      %37 = vsyncadd [#allocation5], %s36
      %s38 = sshll.u32 [#allocation6], 4
      %s39 = int_to_ptr.vmem [resolvable:$true] %s38
      %44 = dma.hbm_to_vmem [thread:$0]  %s2, 1024, %s39, [#allocation5], 64, 64, 4
    $region13: #{tpu_custom_call.1} parent=1 // pred_fallthru
      _
    // Predicated region
    $region14: #{tpu_custom_call.1} parent=1 // pred_check
      _
    $region15: #{tpu_custom_call.1} parent=1 // pred_check_branch
      %46 = sbr.rel (0) target = $region17
    $region16: #{tpu_custom_call.1} parent=1 // pred_region
      %s48 = ssub.s32 1024, 1024
      %49 = vsyncadd [#allocation8], %s48
      %s50 = sshll.u32 [#allocation7], 4
      %s51 = int_to_ptr.vmem [resolvable:$true] %s50
      %56 = dma.hbm_to_vmem [thread:$0]  %s3, 1024, %s51, [#allocation8], 64, 64, 4
    $region17: #{tpu_custom_call.1} parent=1 // pred_fallthru
      _
    // Predicated region
    $region18: #{tpu_custom_call.1} parent=1 // pred_check
      _
    $region19: #{tpu_custom_call.1} parent=1 // pred_check_branch
      %58 = sbr.rel (0) target = $region21
    $region20: #{tpu_custom_call.1} parent=1 // pred_region
      _
    $region21: #{tpu_custom_call.1} parent=1 // pred_fallthru
      _
    // Predicated region
    $region22: #{tpu_custom_call.1} parent=1 // pred_check
      _
    $region23: #{tpu_custom_call.1} parent=1 // pred_check_branch
      %60 = sbr.rel (0) target = $region25
    $region24: #{tpu_custom_call.1} parent=1 // pred_region
      %61 = dma.done [#allocation3], 128
    $region25: #{tpu_custom_call.1} parent=1 // pred_fallthru
      _
    // Predicated region
    $region26: #{tpu_custom_call.1} parent=1 // pred_check
      _
    $region27: #{tpu_custom_call.1} parent=1 // pred_check_branch
      %63 = sbr.rel (0) target = $region29
    $region28: #{tpu_custom_call.1} parent=1 // pred_region
      %64 = dma.done [#allocation5], 64
    $region29: #{tpu_custom_call.1} parent=1 // pred_fallthru
      _
    // Predicated region
    $region30: #{tpu_custom_call.1} parent=1 // pred_check
      _
    $region31: #{tpu_custom_call.1} parent=1 // pred_check_branch
      %66 = sbr.rel (0) target = $region33
    $region32: #{tpu_custom_call.1} parent=1 // pred_region
      %67 = dma.done [#allocation5], 1024
    $region33: #{tpu_custom_call.1} parent=1 // pred_fallthru
      _
    // Predicated region
    $region34: #{tpu_custom_call.1} parent=1 // pred_check
      _
    $region35: #{tpu_custom_call.1} parent=1 // pred_check_branch
      %69 = sbr.rel (0) target = $region37
    $region36: #{tpu_custom_call.1} parent=1 // pred_region
      %70 = dma.done [#allocation8], 1024
    $region37: #{tpu_custom_call.1} parent=1 // pred_fallthru
      _
    %v72 = vld [vmem:[#allocation2] sm:$0xff]
    %v73 = vpack.c.bf16 %v72, %v72
    %v74 = vld [vmem:[#allocation4] sm:$0xf]
    %v75 = vld [vmem:[%s4] sm:$0x1]
    %v76 = vlaneseq
    %v77 = vshrl.u32 %v76, 7
    %v78 = vsub.s32 0, %v77
    %v79 = vrot.slane %v75, %v78
    %vm80 = vcmask 64512
    %v82 = vsel %vm80, %v73, 0
    %vm84 = vcmask 1043456
    %v86 = vsel %vm84, %v74, 0
    %88 = vmatprep.subr.bf16.mxu0 0
    %89 = vmatpush1.bf16.msra.mxu0 0
    %90 = vmatprep.subr.bf16.mxu0 0
    %91 = vmatpush1.bf16.msra.mxu0 0
    %92 = vmatprep.subr.bf16.mxu0 0
    %93 = vmatpush1.bf16.msra.mxu0 0
    %94 = vmatprep.subr.bf16.mxu0 0
    %95 = vmatpush1.bf16.msra.mxu0 0
    %96 = vmatprep.subr.bf16.mxu0 0
    %97 = vmatpush1.bf16.msra.mxu0 0
    %98 = vmatprep.subr.bf16.mxu0 0
    %99 = vmatpush1.bf16.msra.mxu0 0
    %100 = vmatprep.subr.bf16.mxu0 0
    %101 = vmatpush1.bf16.msra.mxu0 0
    %102 = vmatprep.subr.bf16.mxu0 0
    %103 = vmatpush1.bf16.msra.mxu0 %v86
    %104 = vmatprep.subr.bf16.mxu0 0
    %105 = vmatpush2.bf16.msra.mxu0 0
    %106 = vmatprep.subr.bf16.mxu0 0
    %107 = vmatpush2.bf16.msra.mxu0 0
    %108 = vmatprep.subr.bf16.mxu0 0
    %109 = vmatpush2.bf16.msra.mxu0 0
    %110 = vmatprep.subr.bf16.mxu0 0
    %111 = vmatpush2.bf16.msra.mxu0 0
    %112 = vmatprep.subr.bf16.mxu0 0
    %113 = vmatpush2.bf16.msra.mxu0 0
    %114 = vmatprep.subr.bf16.mxu0 0
    %115 = vmatpush2.bf16.msra.mxu0 0
    %116 = vmatprep.subr.bf16.mxu0 0
    %117 = vmatpush2.bf16.msra.mxu0 0
    %118 = vmatprep.subr.bf16.mxu0 0
    %119 = vmatpush2.bf16.msra.mxu0 0
    %120 = vmatprep.mubr.bf16.mxu0 0
    %121 = vmatmul.mubr.bf16.gmra.mxu0 %v82
    %v122 = vpop.f32.mrf.mxu0
    %v123 = vadd.f32 %v79, %v122
    %v124 = vpop.f32.mrf.mxu0
    %v125 = vpop.f32.mrf.mxu0
    %v126 = vpop.f32.mrf.mxu0
    %127 = vdwg.mxu0
    %v128 = vtanh.pop %v123
    %v129 = vpack.c.bf16 %v128, %v128
    %v130 = vld [vmem:[#allocation6] sm:$0xf]
    %v131 = vld [vmem:[#allocation6 + $0x4] sm:$0xf]
    %v132 = vld [vmem:[#allocation6 + $0x8] sm:$0xf]
    %v133 = vld [vmem:[#allocation6 + $0xc] sm:$0xf]
    %v134 = vld [vmem:[#allocation6 + $0x10] sm:$0xf]
    %v135 = vld [vmem:[#allocation6 + $0x14] sm:$0xf]
    %v136 = vld [vmem:[#allocation6 + $0x18] sm:$0xf]
    %v137 = vld [vmem:[#allocation6 + $0x1c] sm:$0xf]
    %v138 = vld [vmem:[#allocation6 + $0x20] sm:$0xf]
    %v139 = vld [vmem:[#allocation6 + $0x24] sm:$0xf]
    %v140 = vld [vmem:[#allocation6 + $0x28] sm:$0xf]
    %v141 = vld [vmem:[#allocation6 + $0x2c] sm:$0xf]
    %v142 = vld [vmem:[#allocation6 + $0x30] sm:$0xf]
    %v143 = vld [vmem:[#allocation6 + $0x34] sm:$0xf]
    %v144 = vld [vmem:[#allocation6 + $0x38] sm:$0xf]
    %v145 = vld [vmem:[#allocation6 + $0x3c] sm:$0xf]
    %v146 = vld [vmem:[%s4 + $0x1] sm:$0x1]
    %v147 = vlaneseq
    %v148 = vshrl.u32 %v147, 7
    %v149 = vsub.s32 0, %v148
    %v150 = vrot.slane %v146, %v149
    %v167 = vunpack.c.l.b16 %v130
    %v168 = vunpack.c.l.b16 %v131
    %v169 = vunpack.c.l.b16 %v132
    %v170 = vunpack.c.l.b16 %v133
    %v171 = vunpack.c.l.b16 %v134
    %v172 = vunpack.c.l.b16 %v135
    %v173 = vunpack.c.l.b16 %v136
    %v174 = vunpack.c.l.b16 %v137
    %v175 = vunpack.c.l.b16 %v138
    %v176 = vunpack.c.l.b16 %v139
    %v177 = vunpack.c.l.b16 %v140
    %v178 = vunpack.c.l.b16 %v141
    %v179 = vunpack.c.l.b16 %v142
    %v180 = vunpack.c.l.b16 %v143
    %v181 = vunpack.c.l.b16 %v144
    %v182 = vunpack.c.l.b16 %v145
    %v183 = vpack.c.b16 %v168, %v167
    %v184 = vpack.c.b16 %v170, %v169
    %v185 = vpack.c.b16 %v172, %v171
    %v186 = vpack.c.b16 %v174, %v173
    %v187 = vpack.c.b16 %v176, %v175
    %v188 = vpack.c.b16 %v178, %v177
    %v189 = vpack.c.b16 %v180, %v179
    %v190 = vpack.c.b16 %v182, %v181
    %199 = vmatprep.subr.bf16.mxu0 0
    %200 = vmatpush1.bf16.msra.mxu0 %v190
    %201 = vmatprep.subr.bf16.mxu0 0
    %202 = vmatpush1.bf16.msra.mxu0 %v189
    %203 = vmatprep.subr.bf16.mxu0 0
    %204 = vmatpush1.bf16.msra.mxu0 %v188
    %205 = vmatprep.subr.bf16.mxu0 0
    %206 = vmatpush1.bf16.msra.mxu0 %v187
    %207 = vmatprep.subr.bf16.mxu0 0
    %208 = vmatpush1.bf16.msra.mxu0 %v186
    %209 = vmatprep.subr.bf16.mxu0 0
    %210 = vmatpush1.bf16.msra.mxu0 %v185
    %211 = vmatprep.subr.bf16.mxu0 0
    %212 = vmatpush1.bf16.msra.mxu0 %v184
    %213 = vmatprep.subr.bf16.mxu0 0
    %214 = vmatpush1.bf16.msra.mxu0 %v183
    %215 = vmatprep.subr.bf16.mxu0 0
    %216 = vmatpush2.bf16.msra.mxu0 0
    %217 = vmatprep.subr.bf16.mxu0 0
    %218 = vmatpush2.bf16.msra.mxu0 0
    %219 = vmatprep.subr.bf16.mxu0 0
    %220 = vmatpush2.bf16.msra.mxu0 0
    %221 = vmatprep.subr.bf16.mxu0 0
    %222 = vmatpush2.bf16.msra.mxu0 0
    %223 = vmatprep.subr.bf16.mxu0 0
    %224 = vmatpush2.bf16.msra.mxu0 0
    %225 = vmatprep.subr.bf16.mxu0 0
    %226 = vmatpush2.bf16.msra.mxu0 0
    %227 = vmatprep.subr.bf16.mxu0 0
    %228 = vmatpush2.bf16.msra.mxu0 0
    %229 = vmatprep.subr.bf16.mxu0 0
    %230 = vmatpush2.bf16.msra.mxu0 0
    %231 = vmatprep.mubr.bf16.mxu0 0
    %232 = vmatmul.mubr.bf16.gmra.mxu0 %v129
    %v233 = vpop.f32.mrf.mxu0
    %v234 = vadd.f32 %v150, %v233
    %v235 = vpop.f32.mrf.mxu0
    %v236 = vpop.f32.mrf.mxu0
    %v237 = vpop.f32.mrf.mxu0
    %238 = vdwg.mxu0
    %v239 = vtanh.pop %v234
    %v240 = vpack.c.bf16 %v239, %v239
    %v241 = vld [vmem:[#allocation7] sm:$0xf]
    %v242 = vld [vmem:[#allocation7 + $0x4] sm:$0xf]
    %v243 = vld [vmem:[#allocation7 + $0x8] sm:$0xf]
    %v244 = vld [vmem:[#allocation7 + $0xc] sm:$0xf]
    %v245 = vld [vmem:[#allocation7 + $0x10] sm:$0xf]
    %v246 = vld [vmem:[#allocation7 + $0x14] sm:$0xf]
    %v247 = vld [vmem:[#allocation7 + $0x18] sm:$0xf]
    %v248 = vld [vmem:[#allocation7 + $0x1c] sm:$0xf]
    %v249 = vld [vmem:[#allocation7 + $0x20] sm:$0xf]
    %v250 = vld [vmem:[#allocation7 + $0x24] sm:$0xf]
    %v251 = vld [vmem:[#allocation7 + $0x28] sm:$0xf]
    %v252 = vld [vmem:[#allocation7 + $0x2c] sm:$0xf]
    %v253 = vld [vmem:[#allocation7 + $0x30] sm:$0xf]
    %v254 = vld [vmem:[#allocation7 + $0x34] sm:$0xf]
    %v255 = vld [vmem:[#allocation7 + $0x38] sm:$0xf]
    %v256 = vld [vmem:[#allocation7 + $0x3c] sm:$0xf]
    %v257 = vld [vmem:[%s4 + $0x2] sm:$0x1]
    %v258 = vlaneseq
    %v259 = vshrl.u32 %v258, 7
    %v260 = vsub.s32 0, %v259
    %v261 = vrot.slane %v257, %v260
    %v278 = vunpack.c.l.b16 %v241
    %v279 = vunpack.c.l.b16 %v242
    %v280 = vunpack.c.l.b16 %v243
    %v281 = vunpack.c.l.b16 %v244
    %v282 = vunpack.c.l.b16 %v245
    %v283 = vunpack.c.l.b16 %v246
    %v284 = vunpack.c.l.b16 %v247
    %v285 = vunpack.c.l.b16 %v248
    %v286 = vunpack.c.l.b16 %v249
    %v287 = vunpack.c.l.b16 %v250
    %v288 = vunpack.c.l.b16 %v251
    %v289 = vunpack.c.l.b16 %v252
    %v290 = vunpack.c.l.b16 %v253
    %v291 = vunpack.c.l.b16 %v254
    %v292 = vunpack.c.l.b16 %v255
    %v293 = vunpack.c.l.b16 %v256
    %v294 = vpack.c.b16 %v279, %v278
    %v295 = vpack.c.b16 %v281, %v280
    %v296 = vpack.c.b16 %v283, %v282
    %v297 = vpack.c.b16 %v285, %v284
    %v298 = vpack.c.b16 %v287, %v286
    %v299 = vpack.c.b16 %v289, %v288
    %v300 = vpack.c.b16 %v291, %v290
    %v301 = vpack.c.b16 %v293, %v292
    %310 = vmatprep.subr.bf16.mxu0 0
    %311 = vmatpush1.bf16.msra.mxu0 %v301
    %312 = vmatprep.subr.bf16.mxu0 0
    %313 = vmatpush1.bf16.msra.mxu0 %v300
    %314 = vmatprep.subr.bf16.mxu0 0
    %315 = vmatpush1.bf16.msra.mxu0 %v299
    %316 = vmatprep.subr.bf16.mxu0 0
    %317 = vmatpush1.bf16.msra.mxu0 %v298
    %318 = vmatprep.subr.bf16.mxu0 0
    %319 = vmatpush1.bf16.msra.mxu0 %v297
    %320 = vmatprep.subr.bf16.mxu0 0
    %321 = vmatpush1.bf16.msra.mxu0 %v296
    %322 = vmatprep.subr.bf16.mxu0 0
    %323 = vmatpush1.bf16.msra.mxu0 %v295
    %324 = vmatprep.subr.bf16.mxu0 0
    %325 = vmatpush1.bf16.msra.mxu0 %v294
    %326 = vmatprep.subr.bf16.mxu0 0
    %327 = vmatpush2.bf16.msra.mxu0 0
    %328 = vmatprep.subr.bf16.mxu0 0
    %329 = vmatpush2.bf16.msra.mxu0 0
    %330 = vmatprep.subr.bf16.mxu0 0
    %331 = vmatpush2.bf16.msra.mxu0 0
    %332 = vmatprep.subr.bf16.mxu0 0
    %333 = vmatpush2.bf16.msra.mxu0 0
    %334 = vmatprep.subr.bf16.mxu0 0
    %335 = vmatpush2.bf16.msra.mxu0 0
    %336 = vmatprep.subr.bf16.mxu0 0
    %337 = vmatpush2.bf16.msra.mxu0 0
    %338 = vmatprep.subr.bf16.mxu0 0
    %339 = vmatpush2.bf16.msra.mxu0 0
    %340 = vmatprep.subr.bf16.mxu0 0
    %341 = vmatpush2.bf16.msra.mxu0 0
    %342 = vmatprep.mubr.bf16.mxu0 0
    %343 = vmatmul.mubr.bf16.gmra.mxu0 %v240
    %v344 = vpop.f32.mrf.mxu0
    %v345 = vadd.f32 %v261, %v344
    %v346 = vpop.f32.mrf.mxu0
    %v347 = vpop.f32.mrf.mxu0
    %v348 = vpop.f32.mrf.mxu0
    %349 = vdwg.mxu0
    %v350 = vlaneseq
    %v351 = vand.u32 %v350, 127
    %vm352 = vcmp.lt.s32.totalorder %v351, 4
    %v353 = vsel %vm352, %v345, -3.4028235e+38
    %354 = vmax.xlane.f32.xlu0 %v353
    %v355 = vpop.xlane.xlu0 %354
    %v356 = vsub.f32 %v353, %v355
    %v357 = vmul.f32 %v356, 1.442695
    %v358 = vpow.pop %v357
    %359 = vadd.xlane.f32.xlu0 %v358
    %v360 = vpop.xlane.xlu0 %359
    %v361 = vrcp.pop %v360
    %v362 = vmul.f32 %v358, %v361
    %vm363 = vcmask 31744
    %364 = vst.msk [vmem:[%s5] sm:$0xff] %vm363, %v362
    // Predicated region
    $region38: #{tpu_custom_call.1} parent=1 // pred_check
      _
    $region39: #{tpu_custom_call.1} parent=1 // pred_check_branch
      %366 = sbr.rel (0) target = $region41
    $region40: #{tpu_custom_call.1} parent=1 // pred_region
      _
    $region41: #{tpu_custom_call.1} parent=1 // pred_fallthru
      _
    // Predicated region
    $region42: #{tpu_custom_call.1} parent=1 // pred_check
      _
    $region43: #{tpu_custom_call.1} parent=1 // pred_check_branch
      %368 = sbr.rel (0) target = $region45
    $region44: #{tpu_custom_call.1} parent=1 // pred_region
      _
    $region45: #{tpu_custom_call.1} parent=1 // pred_fallthru
      _
    %369 = vsyncpa [#allocation3], 1
    %370 = vsyncpa [#allocation5], 1
    %371 = vsyncpa [#allocation8], 1

</llo_original>
